<compile_context>
chip_gen: v7x
topology: tpu7x:2x2x1
jax: 0.10.0
libtpu: 0.0.40
codegen_flags: <defaults>
</compile_context>

<pallas_src>
import functools

import jax
import jax.numpy as jnp
from jax import lax
from jax.experimental import pallas as pl
from jax.experimental.pallas import tpu as pltpu

HIDDEN = (256, 128, 64, 16, 1)


def _round_up(n, m):
    return ((n + m - 1) // m) * m


def _mlp_kernel(x_ref,
                w1_ref, b1_ref,
                w2_ref, b2_ref,
                w3_ref, b3_ref,
                w4_ref, b4_ref,
                w5_ref, b5_ref,
                o_ref,
                *, compute_dtype):
    """Fused MLP forward for one batch tile.

    x_ref: (block_m, D) natural layout.  Layer 1 contracts the trailing D dims
    of w1 (256, D) and x (block_m, D) on the MXU -> (256, block_m), i.e. the
    batch lives in lanes from the first matmul onward.  w2..w4 are (out, in)
    PyTorch nn.Linear layout, biases are (out, 1) f32 columns.  w5 is a
    (16, 1) f32 column so the last layer is a VPU multiply + sublane reduce
    producing the lane-dense (1, block_m) output row directly.
    """
    f32 = jnp.float32
    cd = compute_dtype

    x = x_ref[...]
    if x.dtype != cd:
        x = x.astype(cd)

    # Layer 1: contract D (last dim of both operands) on the MXU.
    h = lax.dot_general(w1_ref[...], x,
                        dimension_numbers=(((1,), (1,)), ((), ())),
                        preferred_element_type=f32)                 # (256, bm)
    h = jnp.maximum(h + b1_ref[...], 0.0)
    if cd != f32:
        h = h.astype(cd)

    # Layers 2-4: (out, in) x (in, bm) MXU matmuls with f32 accumulation.
    for w_ref, b_ref in ((w2_ref, b2_ref), (w3_ref, b3_ref), (w4_ref, b4_ref)):
        h = jnp.dot(w_ref[...], h, preferred_element_type=f32)
        h = jnp.maximum(h + b_ref[...], 0.0)
        if cd != f32:
            h = h.astype(cd)

    # Layer 5 (16 -> 1): VPU broadcast multiply + XLU sublane reduce.
    y = jnp.sum(h.astype(f32) * w5_ref[...], axis=0, keepdims=True) + b5_ref[...]

    o_ref[...] = jax.nn.sigmoid(y).astype(o_ref.dtype)               # (1, bm)


def init_mlp_params(key, input_size, dtype=jnp.float32):
    """Matches the PyTorch module init: weight ~ N(0, 1/(input_size+1)), bias = 0.
    Weights kept in nn.Linear layout: (out_features, in_features)."""
    std = 1.0 / (input_size + 1)
    dims = (input_size,) + HIDDEN
    params = []
    for i in range(len(HIDDEN)):
        key, sub = jax.random.split(key)
        w = std * jax.random.normal(sub, (dims[i + 1], dims[i]), dtype=dtype)
        b = jnp.zeros((dims[i + 1],), dtype=dtype)
        params.append((w, b))
    return params


@functools.partial(jax.jit, static_argnames=("block_m", "compute_dtype"))
def mlp_forward(x, params, block_m=1024, compute_dtype=jnp.bfloat16):
    """x: (B, input_size) -> (B, 1) sigmoid output.

    params: list of (w, b) in PyTorch nn.Linear layout (w: (out, in), b: (out,)).
    block_m: requested batch tile (rounded to a multiple of 128; sweep
             1024-4096 for large B).  Clamped for small B and capped so the
             grid has >= 2 steps (v7x megacore) whenever the batch allows it.
    compute_dtype: jnp.bfloat16 (default; f32 accumulation) or jnp.float32 for
             exact parity.
    """
    B, D = x.shape

    B128 = _round_up(B, 128)
    bm = min(_round_up(block_m, 128), B128)
    if B128 >= 256:
        # Keep >= 2 grid steps so ("parallel",) can shard over v7x's 2 TCs.
        bm = min(bm, _round_up(B128 // 2, 128))
    grid_m = pl.cdiv(B, bm)
    B_pad = grid_m * bm

    # Zero-pad the batch only when it is not tile aligned (elided otherwise).
    # Padded rows produce sigmoid(bias-chain) values that are sliced off below.
    x_in = x if B_pad == B else jnp.pad(x, ((0, B_pad - B), (0, 0)))

    flat_args = [x_in]
    in_specs = [pl.BlockSpec((bm, D), lambda i: (i, 0))]
    for li, (w, b) in enumerate(params):
        if li < len(params) - 1:
            w_k = w.astype(compute_dtype)            # MXU matmul weights
        else:
            w_k = w.T.astype(jnp.float32)            # (16, 1) column, VPU tail
        b_k = b.reshape(-1, 1).astype(jnp.float32)   # (out, 1) f32 column
        flat_args += [w_k, b_k]
        # Grid-invariant full blocks with constant index_map: resident in VMEM
        # across all grid steps, DMA'd from HBM exactly once.
        in_specs += [pl.BlockSpec(w_k.shape, lambda i: (0, 0)),
                     pl.BlockSpec(b_k.shape, lambda i: (0, 0))]

    out_spec = pl.BlockSpec((1, bm), lambda i: (0, i))

    dims = (D,) + HIDDEN
    flops = 2 * B_pad * sum(dims[i] * dims[i + 1] for i in range(len(HIDDEN)))
    param_bytes = sum(int(a.size) * a.dtype.itemsize for a in flat_args[1:])
    cost = pl.CostEstimate(
        flops=int(flops),
        transcendentals=int(B_pad),                  # one exp per row (sigmoid)
        bytes_accessed=int(B_pad * D * x.dtype.itemsize + param_bytes + B_pad * 4),
    )

    out = pl.pallas_call(
        functools.partial(_mlp_kernel, compute_dtype=compute_dtype),
        out_shape=jax.ShapeDtypeStruct((1, B_pad), x.dtype),
        grid_spec=pltpu.PrefetchScalarGridSpec(
            num_scalar_prefetch=0,
            grid=(grid_m,),
            in_specs=in_specs,
            out_specs=out_spec,
        ),
        compiler_params=pltpu.CompilerParams(
            dimension_semantics=("parallel",),
            vmem_limit_bytes=32 * 1024 * 1024,       # v5e default is only 16 MiB
        ),
        cost_estimate=cost,
    )(*flat_args)

    return out[0, :B].reshape(B, 1)


def mlp_reference(x, params):
    """Pure-JAX reference (PyTorch-layout weights) for correctness check."""
    h = x.astype(jnp.float32)
    for i, (w, b) in enumerate(params):
        h = h @ w.T + b
        if i < len(params) - 1:
            h = jnp.maximum(h, 0.0)
    return jax.nn.sigmoid(h)


if __name__ == "__main__":
    key = jax.random.PRNGKey(0)
    input_size = 32

    kp, kx = jax.random.split(key)
    params = init_mlp_params(kp, input_size)

    # Small case (single tile).
    batch = 16
    x = jax.random.normal(kx, (batch, input_size), dtype=jnp.float32)
    ref = mlp_reference(x, params)

    out_f32 = jax.block_until_ready(mlp_forward(x, params, compute_dtype=jnp.float32))
    assert out_f32.shape == (batch, 1), out_f32.shape
    assert jnp.allclose(out_f32, ref, atol=1e-5, rtol=1e-5), (
        f"f32 max abs err = {jnp.max(jnp.abs(out_f32 - ref))}"
    )

    out_bf16 = jax.block_until_ready(mlp_forward(x, params))          # bf16 default
    assert out_bf16.shape == (batch, 1), out_bf16.shape
    assert jnp.allclose(out_bf16, ref, atol=3e-2, rtol=0.0), (
        f"bf16 max abs err = {jnp.max(jnp.abs(out_bf16 - ref))}"
    )

    # Multi-tile case (grid_m >= 2, padded batch) on the default bf16 path.
    batch2 = 384
    x2 = jax.random.normal(jax.random.PRNGKey(1), (batch2, input_size),
                           dtype=jnp.float32)
    ref2 = mlp_reference(x2, params)
    out2 = jax.block_until_ready(mlp_forward(x2, params))
    assert out2.shape == (batch2, 1), out2.shape
    assert jnp.allclose(out2, ref2, atol=3e-2, rtol=0.0), (
        f"bf16 multi-tile max abs err = {jnp.max(jnp.abs(out2 - ref2))}"
    )

    print("KERNEL_OK")
</pallas_src>

<mosaic_0001>
module attributes {stable_mosaic.version = 11 : i64} {
  func.func @_mlp_kernel(%arg0: i32, %arg1: memref<128x32xf32, #tpu.memory_space<vmem>>, %arg2: memref<256x32xf32, #tpu.memory_space<vmem>>, %arg3: memref<256x1xf32, #tpu.memory_space<vmem>>, %arg4: memref<128x256xf32, #tpu.memory_space<vmem>>, %arg5: memref<128x1xf32, #tpu.memory_space<vmem>>, %arg6: memref<64x128xf32, #tpu.memory_space<vmem>>, %arg7: memref<64x1xf32, #tpu.memory_space<vmem>>, %arg8: memref<16x64xf32, #tpu.memory_space<vmem>>, %arg9: memref<16x1xf32, #tpu.memory_space<vmem>>, %arg10: memref<16x1xf32, #tpu.memory_space<vmem>>, %arg11: memref<1x1xf32, #tpu.memory_space<vmem>>, %arg12: memref<1x128xf32, #tpu.memory_space<vmem>>) attributes {dimension_semantics = [#tpu.dimension_semantics<parallel>], iteration_bounds = array<i64: 1>, scalar_prefetch = 0 : i64, scratch_operands = 0 : i64, tpu.core_type = #tpu.core_type<tc>, window_params = [{transform_indices = @transform_0, window_bounds = array<i64: 128, 32>}, {pipeline_mode = #tpu.pipeline_mode<synchronous>, transform_indices = @transform_1, window_bounds = array<i64: 256, 32>}, {pipeline_mode = #tpu.pipeline_mode<synchronous>, transform_indices = @transform_2, window_bounds = array<i64: 256, 1>}, {pipeline_mode = #tpu.pipeline_mode<synchronous>, transform_indices = @transform_3, window_bounds = array<i64: 128, 256>}, {pipeline_mode = #tpu.pipeline_mode<synchronous>, transform_indices = @transform_4, window_bounds = array<i64: 128, 1>}, {pipeline_mode = #tpu.pipeline_mode<synchronous>, transform_indices = @transform_5, window_bounds = array<i64: 64, 128>}, {pipeline_mode = #tpu.pipeline_mode<synchronous>, transform_indices = @transform_6, window_bounds = array<i64: 64, 1>}, {pipeline_mode = #tpu.pipeline_mode<synchronous>, transform_indices = @transform_7, window_bounds = array<i64: 16, 64>}, {pipeline_mode = #tpu.pipeline_mode<synchronous>, transform_indices = @transform_8, window_bounds = array<i64: 16, 1>}, {pipeline_mode = #tpu.pipeline_mode<synchronous>, transform_indices = @transform_9, window_bounds = array<i64: 16, 1>}, {pipeline_mode = #tpu.pipeline_mode<synchronous>, transform_indices = @transform_10, window_bounds = array<i64: 1, 1>}, {transform_indices = @transform_11, window_bounds = array<i64: 1, 128>}]} {
    %c0 = arith.constant 0 : index
    %c0_0 = arith.constant 0 : index
    %0 = vector.load %arg1[%c0, %c0_0] : memref<128x32xf32, #tpu.memory_space<vmem>>, vector<128x32xf32>
    %c0_1 = arith.constant 0 : index
    %c0_2 = arith.constant 0 : index
    %1 = vector.load %arg2[%c0_1, %c0_2] : memref<256x32xf32, #tpu.memory_space<vmem>>, vector<256x32xf32>
    %cst = arith.constant dense<0.000000e+00> : vector<256x128xf32>
    %2 = tpu.matmul %1, %0, %cst {dimension_numbers = #tpu.dot_dimension_numbers<[1], [1], [0], [0], [0, 0, 1, 0], [], []>} : vector<256x32xf32>, vector<128x32xf32>, vector<256x128xf32> -> vector<256x128xf32>
    %c0_3 = arith.constant 0 : index
    %c0_4 = arith.constant 0 : index
    %3 = vector.load %arg3[%c0_3, %c0_4] : memref<256x1xf32, #tpu.memory_space<vmem>>, vector<256x1xf32>
    %4 = vector.broadcast %3 : vector<256x1xf32> to vector<256x128xf32>
    %5 = arith.addf %2, %4 : vector<256x128xf32>
    %cst_5 = arith.constant 0.000000e+00 : f32
    %6 = vector.broadcast %cst_5 : f32 to vector<256x128xf32>
    %7 = arith.maximumf %5, %6 : vector<256x128xf32>
    %c0_6 = arith.constant 0 : index
    %c0_7 = arith.constant 0 : index
    %8 = vector.load %arg4[%c0_6, %c0_7] : memref<128x256xf32, #tpu.memory_space<vmem>>, vector<128x256xf32>
    %cst_8 = arith.constant dense<0.000000e+00> : vector<128x128xf32>
    %9 = tpu.matmul %8, %7, %cst_8 {dimension_numbers = #tpu.dot_dimension_numbers<[1], [0], [0], [1], [0, 0, 1, 1], [], []>} : vector<128x256xf32>, vector<256x128xf32>, vector<128x128xf32> -> vector<128x128xf32>
    %c0_9 = arith.constant 0 : index
    %c0_10 = arith.constant 0 : index
    %10 = vector.load %arg5[%c0_9, %c0_10] : memref<128x1xf32, #tpu.memory_space<vmem>>, vector<128x1xf32>
    %11 = vector.broadcast %10 : vector<128x1xf32> to vector<128x128xf32>
    %12 = arith.addf %9, %11 : vector<128x128xf32>
    %cst_11 = arith.constant 0.000000e+00 : f32
    %13 = vector.broadcast %cst_11 : f32 to vector<128x128xf32>
    %14 = arith.maximumf %12, %13 : vector<128x128xf32>
    %c0_12 = arith.constant 0 : index
    %c0_13 = arith.constant 0 : index
    %15 = vector.load %arg6[%c0_12, %c0_13] : memref<64x128xf32, #tpu.memory_space<vmem>>, vector<64x128xf32>
    %cst_14 = arith.constant dense<0.000000e+00> : vector<64x128xf32>
    %16 = tpu.matmul %15, %14, %cst_14 {dimension_numbers = #tpu.dot_dimension_numbers<[1], [0], [0], [1], [0, 0, 1, 1], [], []>} : vector<64x128xf32>, vector<128x128xf32>, vector<64x128xf32> -> vector<64x128xf32>
    %c0_15 = arith.constant 0 : index
    %c0_16 = arith.constant 0 : index
    %17 = vector.load %arg7[%c0_15, %c0_16] : memref<64x1xf32, #tpu.memory_space<vmem>>, vector<64x1xf32>
    %18 = vector.broadcast %17 : vector<64x1xf32> to vector<64x128xf32>
    %19 = arith.addf %16, %18 : vector<64x128xf32>
    %cst_17 = arith.constant 0.000000e+00 : f32
    %20 = vector.broadcast %cst_17 : f32 to vector<64x128xf32>
    %21 = arith.maximumf %19, %20 : vector<64x128xf32>
    %c0_18 = arith.constant 0 : index
    %c0_19 = arith.constant 0 : index
    %22 = vector.load %arg8[%c0_18, %c0_19] : memref<16x64xf32, #tpu.memory_space<vmem>>, vector<16x64xf32>
    %cst_20 = arith.constant dense<0.000000e+00> : vector<16x128xf32>
    %23 = tpu.matmul %22, %21, %cst_20 {dimension_numbers = #tpu.dot_dimension_numbers<[1], [0], [0], [1], [0, 0, 1, 1], [], []>} : vector<16x64xf32>, vector<64x128xf32>, vector<16x128xf32> -> vector<16x128xf32>
    %c0_21 = arith.constant 0 : index
    %c0_22 = arith.constant 0 : index
    %24 = vector.load %arg9[%c0_21, %c0_22] : memref<16x1xf32, #tpu.memory_space<vmem>>, vector<16x1xf32>
    %25 = vector.broadcast %24 : vector<16x1xf32> to vector<16x128xf32>
    %26 = arith.addf %23, %25 : vector<16x128xf32>
    %cst_23 = arith.constant 0.000000e+00 : f32
    %27 = vector.broadcast %cst_23 : f32 to vector<16x128xf32>
    %28 = arith.maximumf %26, %27 : vector<16x128xf32>
    %c0_24 = arith.constant 0 : index
    %c0_25 = arith.constant 0 : index
    %29 = vector.load %arg10[%c0_24, %c0_25] : memref<16x1xf32, #tpu.memory_space<vmem>>, vector<16x1xf32>
    %30 = vector.broadcast %29 : vector<16x1xf32> to vector<16x128xf32>
    %31 = arith.mulf %28, %30 : vector<16x128xf32>
    %cst_26 = arith.constant dense<0.000000e+00> : vector<128xf32>
    %32 = vector.multi_reduction <add>, %31, %cst_26 [0] : vector<16x128xf32> to vector<128xf32>
    %33 = vector.shape_cast %32 : vector<128xf32> to vector<1x128xf32>
    %c0_27 = arith.constant 0 : index
    %c0_28 = arith.constant 0 : index
    %34 = vector.load %arg11[%c0_27, %c0_28] : memref<1x1xf32, #tpu.memory_space<vmem>>, vector<1x1xf32>
    %35 = vector.broadcast %34 : vector<1x1xf32> to vector<1x128xf32>
    %36 = arith.addf %33, %35 : vector<1x128xf32>
    %37 = arith.negf %36 : vector<1x128xf32>
    %38 = math.exp %37 : vector<1x128xf32>
    %cst_29 = arith.constant 1.000000e+00 : f32
    %39 = vector.broadcast %cst_29 : f32 to vector<1x128xf32>
    %40 = arith.addf %39, %38 : vector<1x128xf32>
    %41 = arith.divf %39, %40 : vector<1x128xf32>
    %c0_30 = arith.constant 0 : index
    %c0_31 = arith.constant 0 : index
    %42 = vector.load %arg12[%c0_30, %c0_31] : memref<1x128xf32, #tpu.memory_space<vmem>>, vector<1x128xf32>
    tpu.vector_store %arg12[%c0_30, %c0_31], %41 {strides = array<i32>} : memref<1x128xf32, #tpu.memory_space<vmem>>, vector<1x128xf32>,
    return
  }
  func.func @transform_0(%arg0: i32) -> (i32, i32) {
    %c0_i32 = arith.constant 0 : i32
    %c0_i32_0 = arith.constant 0 : i32
    return %arg0, %c0_i32 : i32, i32
  }
  func.func @transform_1(%arg0: i32) -> (i32, i32) {
    %c0_i32 = arith.constant 0 : i32
    %c0_i32_0 = arith.constant 0 : i32
    %c0_i32_1 = arith.constant 0 : i32
    return %c0_i32, %c0_i32_0 : i32, i32
  }
  func.func @transform_2(%arg0: i32) -> (i32, i32) {
    %c0_i32 = arith.constant 0 : i32
    %c0_i32_0 = arith.constant 0 : i32
    %c0_i32_1 = arith.constant 0 : i32
    return %c0_i32, %c0_i32_0 : i32, i32
  }
  func.func @transform_3(%arg0: i32) -> (i32, i32) {
    %c0_i32 = arith.constant 0 : i32
    %c0_i32_0 = arith.constant 0 : i32
    %c0_i32_1 = arith.constant 0 : i32
    return %c0_i32, %c0_i32_0 : i32, i32
  }
  func.func @transform_4(%arg0: i32) -> (i32, i32) {
    %c0_i32 = arith.constant 0 : i32
    %c0_i32_0 = arith.constant 0 : i32
    %c0_i32_1 = arith.constant 0 : i32
    return %c0_i32, %c0_i32_0 : i32, i32
  }
  func.func @transform_5(%arg0: i32) -> (i32, i32) {
    %c0_i32 = arith.constant 0 : i32
    %c0_i32_0 = arith.constant 0 : i32
    %c0_i32_1 = arith.constant 0 : i32
    return %c0_i32, %c0_i32_0 : i32, i32
  }
  func.func @transform_6(%arg0: i32) -> (i32, i32) {
    %c0_i32 = arith.constant 0 : i32
    %c0_i32_0 = arith.constant 0 : i32
    %c0_i32_1 = arith.constant 0 : i32
    return %c0_i32, %c0_i32_0 : i32, i32
  }
  func.func @transform_7(%arg0: i32) -> (i32, i32) {
    %c0_i32 = arith.constant 0 : i32
    %c0_i32_0 = arith.constant 0 : i32
    %c0_i32_1 = arith.constant 0 : i32
    return %c0_i32, %c0_i32_0 : i32, i32
  }
  func.func @transform_8(%arg0: i32) -> (i32, i32) {
    %c0_i32 = arith.constant 0 : i32
    %c0_i32_0 = arith.constant 0 : i32
    %c0_i32_1 = arith.constant 0 : i32
    return %c0_i32, %c0_i32_0 : i32, i32
  }
  func.func @transform_9(%arg0: i32) -> (i32, i32) {
    %c0_i32 = arith.constant 0 : i32
    %c0_i32_0 = arith.constant 0 : i32
    %c0_i32_1 = arith.constant 0 : i32
    return %c0_i32, %c0_i32_0 : i32, i32
  }
  func.func @transform_10(%arg0: i32) -> (i32, i32) {
    %c0_i32 = arith.constant 0 : i32
    %c0_i32_0 = arith.constant 0 : i32
    %c0_i32_1 = arith.constant 0 : i32
    return %c0_i32, %c0_i32_0 : i32, i32
  }
  func.func @transform_11(%arg0: i32) -> (i32, i32) {
    %c0_i32 = arith.constant 0 : i32
    %c0_i32_0 = arith.constant 0 : i32
    return %c0_i32, %arg0 : i32, i32
  }
}

</mosaic_0001>

<llo_original>
// kernel: mlp_forward.1
$region0: #{mlp_forward.1}
  #allocation0 [shape = 'u32[]', space=smem, size = 0x4, offset = 0x4, fixed_abs, tag = 'smem constant byte address 0x4 - core index']
  #allocation1 [shape = 'u32[144,128]{1,0:T(1,128)}', space=vmem, size = 0x12000, scoped, tag = 'internal scratch']
  #allocation2 [shape = 'f32[1,1]{1,0:T(1,128)S(1)}', space=vmem, size = 0x200, scoped, tag = 'scoped memory for mlp_forward.1']
  %s0 = inlined_call_operand.vmem [shape: f32[128,32], index: 0, kind: input, shape index: {}]
  %s1 = inlined_call_operand.vmem [shape: f32[256,32], index: 1, kind: input, shape index: {}]
  %s2 = inlined_call_operand.vmem [shape: f32[256,1], index: 2, kind: input, shape index: {}]
  %s3 = inlined_call_operand.vmem [shape: f32[128,256], index: 3, kind: input, shape index: {}]
  %s4 = inlined_call_operand.vmem [shape: f32[128,1], index: 4, kind: input, shape index: {}]
  %s5 = inlined_call_operand.vmem [shape: f32[64,128], index: 5, kind: input, shape index: {}]
  %s6 = inlined_call_operand.vmem [shape: f32[64,1], index: 6, kind: input, shape index: {}]
  %s7 = inlined_call_operand.vmem [shape: f32[16,64], index: 7, kind: input, shape index: {}]
  %s8 = inlined_call_operand.vmem [shape: f32[16,1], index: 8, kind: input, shape index: {}]
  %s9 = inlined_call_operand.vmem [shape: f32[16,1], index: 9, kind: input, shape index: {}]
  %s10 = inlined_call_operand.<no memory space> [shape: f32[1,1], index: 10, kind: input, shape index: {}]
  %s11 = inlined_call_operand.vmem [shape: f32[1,128], index: 11, kind: output, shape index: {}]
  %s12 = sld [smem:[#allocation0]]
  $region54: #{mlp_forward.1} parent=0
    _
  %s14 = ssub.s32 1, %s12
  %s15 = scalar_select 0, %s14, %s12
  %v16 = vstv %s10
  %17 = vst [vmem:[#allocation2] sm:$0x1] %v16
  // Predicated region
  $region2: #{mlp_forward.1} parent=0 // pred_check
    _
  $region3: #{mlp_forward.1} parent=0 // pred_check_branch
    %19 = sbr.rel (0) target = $region5
  $region4: #{mlp_forward.1} parent=0 // pred_region
    _
  $region5: #{mlp_forward.1} parent=0 // pred_fallthru
    _
  // Predicated region
  $region6: #{mlp_forward.1} parent=0 // pred_check
    _
  $region7: #{mlp_forward.1} parent=0 // pred_check_branch
    %21 = sbr.rel (0) target = $region9
  $region8: #{mlp_forward.1} parent=0 // pred_region
    _
  $region9: #{mlp_forward.1} parent=0 // pred_fallthru
    _
  // Predicated region
  $region10: #{mlp_forward.1} parent=0 // pred_check
    _
  $region11: #{mlp_forward.1} parent=0 // pred_check_branch
    %23 = sbr.rel (0) target = $region13
  $region12: #{mlp_forward.1} parent=0 // pred_region
    _
  $region13: #{mlp_forward.1} parent=0 // pred_fallthru
    _
  // Predicated region
  $region14: #{mlp_forward.1} parent=0 // pred_check
    _
  $region15: #{mlp_forward.1} parent=0 // pred_check_branch
    %25 = sbr.rel (0) target = $region17
  $region16: #{mlp_forward.1} parent=0 // pred_region
    _
  $region17: #{mlp_forward.1} parent=0 // pred_fallthru
    _
  // Predicated region
  $region18: #{mlp_forward.1} parent=0 // pred_check
    _
  $region19: #{mlp_forward.1} parent=0 // pred_check_branch
    %27 = sbr.rel (0) target = $region21
  $region20: #{mlp_forward.1} parent=0 // pred_region
    _
  $region21: #{mlp_forward.1} parent=0 // pred_fallthru
    _
  // Predicated region
  $region22: #{mlp_forward.1} parent=0 // pred_check
    _
  $region23: #{mlp_forward.1} parent=0 // pred_check_branch
    %29 = sbr.rel (0) target = $region25
  $region24: #{mlp_forward.1} parent=0 // pred_region
    _
  $region25: #{mlp_forward.1} parent=0 // pred_fallthru
    _
  // Predicated region
  $region26: #{mlp_forward.1} parent=0 // pred_check
    _
  $region27: #{mlp_forward.1} parent=0 // pred_check_branch
    %31 = sbr.rel (0) target = $region29
  $region28: #{mlp_forward.1} parent=0 // pred_region
    _
  $region29: #{mlp_forward.1} parent=0 // pred_fallthru
    _
  // Predicated region
  $region30: #{mlp_forward.1} parent=0 // pred_check
    _
  $region31: #{mlp_forward.1} parent=0 // pred_check_branch
    %33 = sbr.rel (0) target = $region33
  $region32: #{mlp_forward.1} parent=0 // pred_region
    _
  $region33: #{mlp_forward.1} parent=0 // pred_fallthru
    _
  // Predicated region
  $region34: #{mlp_forward.1} parent=0 // pred_check
    _
  $region35: #{mlp_forward.1} parent=0 // pred_check_branch
    %35 = sbr.rel (0) target = $region37
  $region36: #{mlp_forward.1} parent=0 // pred_region
    _
  $region37: #{mlp_forward.1} parent=0 // pred_fallthru
    _
  // Predicated region
  $region38: #{mlp_forward.1} parent=0 // pred_check
    _
  $region39: #{mlp_forward.1} parent=0 // pred_check_branch
    %37 = sbr.rel (0) target = $region41
  $region40: #{mlp_forward.1} parent=0 // pred_region
    _
  $region41: #{mlp_forward.1} parent=0 // pred_fallthru
    _
  // Predicated region
  $region42: #{mlp_forward.1} parent=0 // pred_check
    _
  $region43: #{mlp_forward.1} parent=0 // pred_check_branch
    %39 = sbr.rel (0) target = $region45
  $region44: #{mlp_forward.1} parent=0 // pred_region
    _
  $region45: #{mlp_forward.1} parent=0 // pred_fallthru
    _
  %v40 = vld [vmem:[%s0] sm:$0xff]
  %v41 = vld [vmem:[%s0 + $0x8] sm:$0xff]
  %v42 = vld [vmem:[%s0 + $0x10] sm:$0xff]
  %v43 = vld [vmem:[%s0 + $0x18] sm:$0xff]
  %v44 = vld [vmem:[%s0 + $0x20] sm:$0xff]
  %v45 = vld [vmem:[%s0 + $0x28] sm:$0xff]
  %v46 = vld [vmem:[%s0 + $0x30] sm:$0xff]
  %v47 = vld [vmem:[%s0 + $0x38] sm:$0xff]
  %v48 = vld [vmem:[%s0 + $0x40] sm:$0xff]
  %v49 = vld [vmem:[%s0 + $0x48] sm:$0xff]
  %v50 = vld [vmem:[%s0 + $0x50] sm:$0xff]
  %v51 = vld [vmem:[%s0 + $0x58] sm:$0xff]
  %v52 = vld [vmem:[%s0 + $0x60] sm:$0xff]
  %v53 = vld [vmem:[%s0 + $0x68] sm:$0xff]
  %v54 = vld [vmem:[%s0 + $0x70] sm:$0xff]
  %v55 = vld [vmem:[%s0 + $0x78] sm:$0xff]
  %v56 = vld [vmem:[%s1] sm:$0xff]
  %v57 = vld [vmem:[%s1 + $0x8] sm:$0xff]
  %v58 = vld [vmem:[%s1 + $0x10] sm:$0xff]
  %v59 = vld [vmem:[%s1 + $0x18] sm:$0xff]
  %v60 = vld [vmem:[%s1 + $0x20] sm:$0xff]
  %v61 = vld [vmem:[%s1 + $0x28] sm:$0xff]
  %v62 = vld [vmem:[%s1 + $0x30] sm:$0xff]
  %v63 = vld [vmem:[%s1 + $0x38] sm:$0xff]
  %v64 = vld [vmem:[%s1 + $0x40] sm:$0xff]
  %v65 = vld [vmem:[%s1 + $0x48] sm:$0xff]
  %v66 = vld [vmem:[%s1 + $0x50] sm:$0xff]
  %v67 = vld [vmem:[%s1 + $0x58] sm:$0xff]
  %v68 = vld [vmem:[%s1 + $0x60] sm:$0xff]
  %v69 = vld [vmem:[%s1 + $0x68] sm:$0xff]
  %v70 = vld [vmem:[%s1 + $0x70] sm:$0xff]
  %v71 = vld [vmem:[%s1 + $0x78] sm:$0xff]
  %v72 = vld [vmem:[%s1 + $0x80] sm:$0xff]
  %v73 = vld [vmem:[%s1 + $0x88] sm:$0xff]
  %v74 = vld [vmem:[%s1 + $0x90] sm:$0xff]
  %v75 = vld [vmem:[%s1 + $0x98] sm:$0xff]
  %v76 = vld [vmem:[%s1 + $0xa0] sm:$0xff]
  %v77 = vld [vmem:[%s1 + $0xa8] sm:$0xff]
  %v78 = vld [vmem:[%s1 + $0xb0] sm:$0xff]
  %v79 = vld [vmem:[%s1 + $0xb8] sm:$0xff]
  %v80 = vld [vmem:[%s1 + $0xc0] sm:$0xff]
  %v81 = vld [vmem:[%s1 + $0xc8] sm:$0xff]
  %v82 = vld [vmem:[%s1 + $0xd0] sm:$0xff]
  %v83 = vld [vmem:[%s1 + $0xd8] sm:$0xff]
  %v84 = vld [vmem:[%s1 + $0xe0] sm:$0xff]
  %v85 = vld [vmem:[%s1 + $0xe8] sm:$0xff]
  %v86 = vld [vmem:[%s1 + $0xf0] sm:$0xff]
  %v87 = vld [vmem:[%s1 + $0xf8] sm:$0xff]
  %v88 = vld [vmem:[%s2] sm:$0xff]
  %v89 = vld [vmem:[%s2 + $0x8] sm:$0xff]
  %v90 = vld [vmem:[%s2 + $0x10] sm:$0xff]
  %v91 = vld [vmem:[%s2 + $0x18] sm:$0xff]
  %v92 = vld [vmem:[%s2 + $0x20] sm:$0xff]
  %v93 = vld [vmem:[%s2 + $0x28] sm:$0xff]
  %v94 = vld [vmem:[%s2 + $0x30] sm:$0xff]
  %v95 = vld [vmem:[%s2 + $0x38] sm:$0xff]
  %v96 = vld [vmem:[%s2 + $0x40] sm:$0xff]
  %v97 = vld [vmem:[%s2 + $0x48] sm:$0xff]
  %v98 = vld [vmem:[%s2 + $0x50] sm:$0xff]
  %v99 = vld [vmem:[%s2 + $0x58] sm:$0xff]
  %v100 = vld [vmem:[%s2 + $0x60] sm:$0xff]
  %v101 = vld [vmem:[%s2 + $0x68] sm:$0xff]
  %v102 = vld [vmem:[%s2 + $0x70] sm:$0xff]
  %v103 = vld [vmem:[%s2 + $0x78] sm:$0xff]
  %v104 = vld [vmem:[%s2 + $0x80] sm:$0xff]
  %v105 = vld [vmem:[%s2 + $0x88] sm:$0xff]
  %v106 = vld [vmem:[%s2 + $0x90] sm:$0xff]
  %v107 = vld [vmem:[%s2 + $0x98] sm:$0xff]
  %v108 = vld [vmem:[%s2 + $0xa0] sm:$0xff]
  %v109 = vld [vmem:[%s2 + $0xa8] sm:$0xff]
  %v110 = vld [vmem:[%s2 + $0xb0] sm:$0xff]
  %v111 = vld [vmem:[%s2 + $0xb8] sm:$0xff]
  %v112 = vld [vmem:[%s2 + $0xc0] sm:$0xff]
  %v113 = vld [vmem:[%s2 + $0xc8] sm:$0xff]
  %v114 = vld [vmem:[%s2 + $0xd0] sm:$0xff]
  %v115 = vld [vmem:[%s2 + $0xd8] sm:$0xff]
  %v116 = vld [vmem:[%s2 + $0xe0] sm:$0xff]
  %v117 = vld [vmem:[%s2 + $0xe8] sm:$0xff]
  %v118 = vld [vmem:[%s2 + $0xf0] sm:$0xff]
  %v119 = vld [vmem:[%s2 + $0xf8] sm:$0xff]
  %121 = vset.pattern.permute.xlu0 0
  %122 = vperm.xlu0 %121, %v88
  %v123 = vpop.permute.xlu0 %122
  %126 = vset.pattern.permute.xlu0 0
  %127 = vperm.xlu0 %126, %v89
  %v128 = vpop.permute.xlu0 %127
  %131 = vset.pattern.permute.xlu0 0
  %132 = vperm.xlu0 %131, %v90
  %v133 = vpop.permute.xlu0 %132
  %136 = vset.pattern.permute.xlu0 0
  %137 = vperm.xlu0 %136, %v91
  %v138 = vpop.permute.xlu0 %137
  %141 = vset.pattern.permute.xlu0 0
  %142 = vperm.xlu0 %141, %v92
  %v143 = vpop.permute.xlu0 %142
  %146 = vset.pattern.permute.xlu0 0
  %147 = vperm.xlu0 %146, %v93
  %v148 = vpop.permute.xlu0 %147
  %151 = vset.pattern.permute.xlu0 0
  %152 = vperm.xlu0 %151, %v94
  %v153 = vpop.permute.xlu0 %152
  %156 = vset.pattern.permute.xlu0 0
  %157 = vperm.xlu0 %156, %v95
  %v158 = vpop.permute.xlu0 %157
  %161 = vset.pattern.permute.xlu0 0
  %162 = vperm.xlu0 %161, %v96
  %v163 = vpop.permute.xlu0 %162
  %166 = vset.pattern.permute.xlu0 0
  %167 = vperm.xlu0 %166, %v97
  %v168 = vpop.permute.xlu0 %167
  %171 = vset.pattern.permute.xlu0 0
  %172 = vperm.xlu0 %171, %v98
  %v173 = vpop.permute.xlu0 %172
  %176 = vset.pattern.permute.xlu0 0
  %177 = vperm.xlu0 %176, %v99
  %v178 = vpop.permute.xlu0 %177
  %181 = vset.pattern.permute.xlu0 0
  %182 = vperm.xlu0 %181, %v100
  %v183 = vpop.permute.xlu0 %182
  %186 = vset.pattern.permute.xlu0 0
  %187 = vperm.xlu0 %186, %v101
  %v188 = vpop.permute.xlu0 %187
  %191 = vset.pattern.permute.xlu0 0
  %192 = vperm.xlu0 %191, %v102
  %v193 = vpop.permute.xlu0 %192
  %196 = vset.pattern.permute.xlu0 0
  %197 = vperm.xlu0 %196, %v103
  %v198 = vpop.permute.xlu0 %197
  %201 = vset.pattern.permute.xlu0 0
  %202 = vperm.xlu0 %201, %v104
  %v203 = vpop.permute.xlu0 %202
  %206 = vset.pattern.permute.xlu0 0
  %207 = vperm.xlu0 %206, %v105
  %v208 = vpop.permute.xlu0 %207
  %211 = vset.pattern.permute.xlu0 0
  %212 = vperm.xlu0 %211, %v106
  %v213 = vpop.permute.xlu0 %212
  %216 = vset.pattern.permute.xlu0 0
  %217 = vperm.xlu0 %216, %v107
  %v218 = vpop.permute.xlu0 %217
  %221 = vset.pattern.permute.xlu0 0
  %222 = vperm.xlu0 %221, %v108
  %v223 = vpop.permute.xlu0 %222
  %226 = vset.pattern.permute.xlu0 0
  %227 = vperm.xlu0 %226, %v109
  %v228 = vpop.permute.xlu0 %227
  %231 = vset.pattern.permute.xlu0 0
  %232 = vperm.xlu0 %231, %v110
  %v233 = vpop.permute.xlu0 %232
  %236 = vset.pattern.permute.xlu0 0
  %237 = vperm.xlu0 %236, %v111
  %v238 = vpop.permute.xlu0 %237
  %241 = vset.pattern.permute.xlu0 0
  %242 = vperm.xlu0 %241, %v112
  %v243 = vpop.permute.xlu0 %242
  %246 = vset.pattern.permute.xlu0 0
  %247 = vperm.xlu0 %246, %v113
  %v248 = vpop.permute.xlu0 %247
  %251 = vset.pattern.permute.xlu0 0
  %252 = vperm.xlu0 %251, %v114
  %v253 = vpop.permute.xlu0 %252
  %256 = vset.pattern.permute.xlu0 0
  %257 = vperm.xlu0 %256, %v115
  %v258 = vpop.permute.xlu0 %257
  %261 = vset.pattern.permute.xlu0 0
  %262 = vperm.xlu0 %261, %v116
  %v263 = vpop.permute.xlu0 %262
  %266 = vset.pattern.permute.xlu0 0
  %267 = vperm.xlu0 %266, %v117
  %v268 = vpop.permute.xlu0 %267
  %271 = vset.pattern.permute.xlu0 0
  %272 = vperm.xlu0 %271, %v118
  %v273 = vpop.permute.xlu0 %272
  %276 = vset.pattern.permute.xlu0 0
  %277 = vperm.xlu0 %276, %v119
  %v278 = vpop.permute.xlu0 %277
  %vm280 = vcmask 261120
  %v282 = vsel %vm280, %v56, 0
  %v285 = vsel %vm280, %v57, 0
  %v288 = vsel %vm280, %v58, 0
  %v291 = vsel %vm280, %v59, 0
  %v294 = vsel %vm280, %v60, 0
  %v297 = vsel %vm280, %v61, 0
  %v300 = vsel %vm280, %v62, 0
  %v303 = vsel %vm280, %v63, 0
  %v306 = vsel %vm280, %v64, 0
  %v309 = vsel %vm280, %v65, 0
  %v312 = vsel %vm280, %v66, 0
  %v315 = vsel %vm280, %v67, 0
  %v318 = vsel %vm280, %v68, 0
  %v321 = vsel %vm280, %v69, 0
  %v324 = vsel %vm280, %v70, 0
  %v327 = vsel %vm280, %v71, 0
  %v330 = vsel %vm280, %v72, 0
  %v333 = vsel %vm280, %v73, 0
  %v336 = vsel %vm280, %v74, 0
  %v339 = vsel %vm280, %v75, 0
  %v342 = vsel %vm280, %v76, 0
  %v345 = vsel %vm280, %v77, 0
  %v348 = vsel %vm280, %v78, 0
  %v351 = vsel %vm280, %v79, 0
  %v354 = vsel %vm280, %v80, 0
  %v357 = vsel %vm280, %v81, 0
  %v360 = vsel %vm280, %v82, 0
  %v363 = vsel %vm280, %v83, 0
  %v366 = vsel %vm280, %v84, 0
  %v369 = vsel %vm280, %v85, 0
  %v372 = vsel %vm280, %v86, 0
  %v375 = vsel %vm280, %v87, 0
  %v378 = vsel %vm280, %v40, 0
  %v381 = vsel %vm280, %v41, 0
  %v384 = vsel %vm280, %v42, 0
  %v387 = vsel %vm280, %v43, 0
  %v390 = vsel %vm280, %v44, 0
  %v393 = vsel %vm280, %v45, 0
  %v396 = vsel %vm280, %v46, 0
  %v399 = vsel %vm280, %v47, 0
  %v402 = vsel %vm280, %v48, 0
  %v405 = vsel %vm280, %v49, 0
  %v408 = vsel %vm280, %v50, 0
  %v411 = vsel %vm280, %v51, 0
  %v414 = vsel %vm280, %v52, 0
  %v417 = vsel %vm280, %v53, 0
  %v420 = vsel %vm280, %v54, 0
  %v423 = vsel %vm280, %v55, 0
  %425 = vmatprep.subr.mxu0 0.0
  %426 = vmatpush1.xpose.msra.mxu0 %v378
  %427 = vmatprep.subr.mxu0 0.0
  %428 = vmatpush1.xpose.msra.mxu0 %v381
  %429 = vmatprep.subr.mxu0 0.0
  %430 = vmatpush1.xpose.msra.mxu0 %v384
  %431 = vmatprep.subr.mxu0 0.0
  %432 = vmatpush1.xpose.msra.mxu0 %v387
  %433 = vmatprep.subr.mxu0 0.0
  %434 = vmatpush1.xpose.msra.mxu0 %v390
  %435 = vmatprep.subr.mxu0 0.0
  %436 = vmatpush1.xpose.msra.mxu0 %v393
  %437 = vmatprep.subr.mxu0 0.0
  %438 = vmatpush1.xpose.msra.mxu0 %v396
  %439 = vmatprep.subr.mxu0 0.0
  %440 = vmatpush1.xpose.msra.mxu0 %v399
  %441 = vmatprep.subr.mxu0 0.0
  %442 = vmatpush1.xpose.msra.mxu0 %v402
  %443 = vmatprep.subr.mxu0 0.0
  %444 = vmatpush1.xpose.msra.mxu0 %v405
  %445 = vmatprep.subr.mxu0 0.0
  %446 = vmatpush1.xpose.msra.mxu0 %v408
  %447 = vmatprep.subr.mxu0 0.0
  %448 = vmatpush1.xpose.msra.mxu0 %v411
  %449 = vmatprep.subr.mxu0 0.0
  %450 = vmatpush1.xpose.msra.mxu0 %v414
  %451 = vmatprep.subr.mxu0 0.0
  %452 = vmatpush1.xpose.msra.mxu0 %v417
  %453 = vmatprep.subr.mxu0 0.0
  %454 = vmatpush1.xpose.msra.mxu0 %v420
  %455 = vmatprep.subr.mxu0 0.0
  %456 = vmatpush1.xpose.msra.mxu0 %v423
  %457 = vmatprep.subr.mxu0 0.0
  %458 = vmatpush1.xpose.msra.mxu0 0.0
  %459 = vmatprep.subr.mxu0 0.0
  %460 = vmatpush1.xpose.msra.mxu0 0.0
  %461 = vmatprep.subr.mxu0 0.0
  %462 = vmatpush1.xpose.msra.mxu0 0.0
  %463 = vmatprep.subr.mxu0 0.0
  %464 = vmatpush1.xpose.msra.mxu0 0.0
  %465 = vmatprep.subr.mxu0 0.0
  %466 = vmatpush1.xpose.msra.mxu0 0.0
  %467 = vmatprep.subr.mxu0 0.0
  %468 = vmatpush1.xpose.msra.mxu0 0.0
  %469 = vmatprep.subr.mxu0 0.0
  %470 = vmatpush1.xpose.msra.mxu0 0.0
  %471 = vmatprep.subr.mxu0 0.0
  %472 = vmatpush1.xpose.msra.mxu0 0.0
  %473 = vmatprep.subr.mxu0 0.0
  %474 = vmatpush1.xpose.msra.mxu0 0.0
  %475 = vmatprep.subr.mxu0 0.0
  %476 = vmatpush1.xpose.msra.mxu0 0.0
  %477 = vmatprep.subr.mxu0 0.0
  %478 = vmatpush1.xpose.msra.mxu0 0.0
  %479 = vmatprep.subr.mxu0 0.0
  %480 = vmatpush1.xpose.msra.mxu0 0.0
  %481 = vmatprep.subr.mxu0 0.0
  %482 = vmatpush1.xpose.msra.mxu0 0.0
  %483 = vmatprep.subr.mxu0 0.0
  %484 = vmatpush1.xpose.msra.mxu0 0.0
  %485 = vmatprep.subr.mxu0 0.0
  %486 = vmatpush1.xpose.msra.mxu0 0.0
  %487 = vmatprep.subr.mxu0 0.0
  %488 = vmatpush1.xpose.msra.mxu0 0.0
  %489 = vmatprep.mubr.f32.mxu0 0.0
  %490 = vmatmul.mubr.f32.gmra.mrb[0].mxu0 %v282
  %v491 = vpop.f32.mrb[0].mxu0
  %v492 = vadd.f32 %v123, %v491
  %v493 = vpop.f32.mrb[0].mxu0
  %494 = vmatprep.mubr.f32.mxu0 0.0
  %495 = vmatmul.mubr.f32.gmra.mrb[0].mxu0 %v285
  %v496 = vpop.f32.mrb[0].mxu0
  %v497 = vadd.f32 %v128, %v496
  %v498 = vpop.f32.mrb[0].mxu0
  %499 = vmatprep.mubr.f32.mxu0 0.0
  %500 = vmatmul.mubr.f32.gmra.mrb[0].mxu0 %v288
  %v501 = vpop.f32.mrb[0].mxu0
  %v502 = vadd.f32 %v133, %v501
  %v503 = vpop.f32.mrb[0].mxu0
  %504 = vmatprep.mubr.f32.mxu0 0.0
  %505 = vmatmul.mubr.f32.gmra.mrb[0].mxu0 %v291
  %v506 = vpop.f32.mrb[0].mxu0
  %v507 = vadd.f32 %v138, %v506
  %v508 = vpop.f32.mrb[0].mxu0
  %509 = vmatprep.mubr.f32.mxu0 0.0
  %510 = vmatmul.mubr.f32.gmra.mrb[0].mxu0 %v294
  %v511 = vpop.f32.mrb[0].mxu0
  %v512 = vadd.f32 %v143, %v511
  %v513 = vpop.f32.mrb[0].mxu0
  %514 = vmatprep.mubr.f32.mxu0 0.0
  %515 = vmatmul.mubr.f32.gmra.mrb[0].mxu0 %v297
  %v516 = vpop.f32.mrb[0].mxu0
  %v517 = vadd.f32 %v148, %v516
  %v518 = vpop.f32.mrb[0].mxu0
  %519 = vmatprep.mubr.f32.mxu0 0.0
  %520 = vmatmul.mubr.f32.gmra.mrb[0].mxu0 %v300
  %v521 = vpop.f32.mrb[0].mxu0
  %v522 = vadd.f32 %v153, %v521
  %v523 = vpop.f32.mrb[0].mxu0
  %524 = vmatprep.mubr.f32.mxu0 0.0
  %525 = vmatmul.mubr.f32.gmra.mrb[0].mxu0 %v303
  %v526 = vpop.f32.mrb[0].mxu0
  %v527 = vadd.f32 %v158, %v526
  %v528 = vpop.f32.mrb[0].mxu0
  %529 = vmatprep.mubr.f32.mxu0 0.0
  %530 = vmatmul.mubr.f32.gmra.mrb[0].mxu0 %v306
  %v531 = vpop.f32.mrb[0].mxu0
  %v532 = vadd.f32 %v163, %v531
  %v533 = vpop.f32.mrb[0].mxu0
  %534 = vmatprep.mubr.f32.mxu0 0.0
  %535 = vmatmul.mubr.f32.gmra.mrb[0].mxu0 %v309
  %v536 = vpop.f32.mrb[0].mxu0
  %v537 = vadd.f32 %v168, %v536
  %v538 = vpop.f32.mrb[0].mxu0
  %539 = vmatprep.mubr.f32.mxu0 0.0
  %540 = vmatmul.mubr.f32.gmra.mrb[0].mxu0 %v312
  %v541 = vpop.f32.mrb[0].mxu0
  %v542 = vadd.f32 %v173, %v541
  %v543 = vpop.f32.mrb[0].mxu0
  %544 = vmatprep.mubr.f32.mxu0 0.0
  %545 = vmatmul.mubr.f32.gmra.mrb[0].mxu0 %v315
  %v546 = vpop.f32.mrb[0].mxu0
  %v547 = vadd.f32 %v178, %v546
  %v548 = vpop.f32.mrb[0].mxu0
  %549 = vmatprep.mubr.f32.mxu0 0.0
  %550 = vmatmul.mubr.f32.gmra.mrb[0].mxu0 %v318
  %v551 = vpop.f32.mrb[0].mxu0
  %v552 = vadd.f32 %v183, %v551
  %v553 = vpop.f32.mrb[0].mxu0
  %554 = vmatprep.mubr.f32.mxu0 0.0
  %555 = vmatmul.mubr.f32.gmra.mrb[0].mxu0 %v321
  %v556 = vpop.f32.mrb[0].mxu0
  %v557 = vadd.f32 %v188, %v556
  %v558 = vpop.f32.mrb[0].mxu0
  %559 = vmatprep.mubr.f32.mxu0 0.0
  %560 = vmatmul.mubr.f32.gmra.mrb[0].mxu0 %v324
  %v561 = vpop.f32.mrb[0].mxu0
  %v562 = vadd.f32 %v193, %v561
  %v563 = vpop.f32.mrb[0].mxu0
  %564 = vmatprep.mubr.f32.mxu0 0.0
  %565 = vmatmul.mubr.f32.gmra.mrb[0].mxu0 %v327
  %v566 = vpop.f32.mrb[0].mxu0
  %v567 = vadd.f32 %v198, %v566
  %v568 = vpop.f32.mrb[0].mxu0
  %569 = vmatprep.mubr.f32.mxu0 0.0
  %570 = vmatmul.mubr.f32.gmra.mrb[0].mxu0 %v330
  %v571 = vpop.f32.mrb[0].mxu0
  %v572 = vadd.f32 %v203, %v571
  %v573 = vpop.f32.mrb[0].mxu0
  %574 = vmatprep.mubr.f32.mxu0 0.0
  %575 = vmatmul.mubr.f32.gmra.mrb[0].mxu0 %v333
  %v576 = vpop.f32.mrb[0].mxu0
  %v577 = vadd.f32 %v208, %v576
  %v578 = vpop.f32.mrb[0].mxu0
  %579 = vmatprep.mubr.f32.mxu0 0.0
  %580 = vmatmul.mubr.f32.gmra.mrb[0].mxu0 %v336
  %v581 = vpop.f32.mrb[0].mxu0
  %v582 = vadd.f32 %v213, %v581
  %v583 = vpop.f32.mrb[0].mxu0
  %584 = vmatprep.mubr.f32.mxu0 0.0
  %585 = vmatmul.mubr.f32.gmra.mrb[0].mxu0 %v339
  %v586 = vpop.f32.mrb[0].mxu0
  %v587 = vadd.f32 %v218, %v586
  %v588 = vpop.f32.mrb[0].mxu0
  %589 = vmatprep.mubr.f32.mxu0 0.0
  %590 = vmatmul.mubr.f32.gmra.mrb[0].mxu0 %v342
  %v591 = vpop.f32.mrb[0].mxu0
  %v592 = vadd.f32 %v223, %v591
  %v593 = vpop.f32.mrb[0].mxu0
  %594 = vmatprep.mubr.f32.mxu0 0.0
  %595 = vmatmul.mubr.f32.gmra.mrb[0].mxu0 %v345
  %v596 = vpop.f32.mrb[0].mxu0
  %v597 = vadd.f32 %v228, %v596
  %v598 = vpop.f32.mrb[0].mxu0
  %599 = vmatprep.mubr.f32.mxu0 0.0
  %600 = vmatmul.mubr.f32.gmra.mrb[0].mxu0 %v348
  %v601 = vpop.f32.mrb[0].mxu0
  %v602 = vadd.f32 %v233, %v601
  %v603 = vpop.f32.mrb[0].mxu0
  %604 = vmatprep.mubr.f32.mxu0 0.0
  %605 = vmatmul.mubr.f32.gmra.mrb[0].mxu0 %v351
  %v606 = vpop.f32.mrb[0].mxu0
  %v607 = vadd.f32 %v238, %v606
  %v608 = vpop.f32.mrb[0].mxu0
  %609 = vmatprep.mubr.f32.mxu0 0.0
  %610 = vmatmul.mubr.f32.gmra.mrb[0].mxu0 %v354
  %v611 = vpop.f32.mrb[0].mxu0
  %v612 = vadd.f32 %v243, %v611
  %v613 = vpop.f32.mrb[0].mxu0
  %614 = vmatprep.mubr.f32.mxu0 0.0
  %615 = vmatmul.mubr.f32.gmra.mrb[0].mxu0 %v357
  %v616 = vpop.f32.mrb[0].mxu0
  %v617 = vadd.f32 %v248, %v616
  %v618 = vpop.f32.mrb[0].mxu0
  %619 = vmatprep.mubr.f32.mxu0 0.0
  %620 = vmatmul.mubr.f32.gmra.mrb[0].mxu0 %v360
  %v621 = vpop.f32.mrb[0].mxu0
  %v622 = vadd.f32 %v253, %v621
  %v623 = vpop.f32.mrb[0].mxu0
  %624 = vmatprep.mubr.f32.mxu0 0.0
  %625 = vmatmul.mubr.f32.gmra.mrb[0].mxu0 %v363
  %v626 = vpop.f32.mrb[0].mxu0
  %v627 = vadd.f32 %v258, %v626
  %v628 = vpop.f32.mrb[0].mxu0
  %629 = vmatprep.mubr.f32.mxu0 0.0
  %630 = vmatmul.mubr.f32.gmra.mrb[0].mxu0 %v366
  %v631 = vpop.f32.mrb[0].mxu0
  %v632 = vadd.f32 %v263, %v631
  %v633 = vpop.f32.mrb[0].mxu0
  %634 = vmatprep.mubr.f32.mxu0 0.0
  %635 = vmatmul.mubr.f32.gmra.mrb[0].mxu0 %v369
  %v636 = vpop.f32.mrb[0].mxu0
  %v637 = vadd.f32 %v268, %v636
  %v638 = vpop.f32.mrb[0].mxu0
  %639 = vmatprep.mubr.f32.mxu0 0.0
  %640 = vmatmul.mubr.f32.gmra.mrb[0].mxu0 %v372
  %v641 = vpop.f32.mrb[0].mxu0
  %v642 = vadd.f32 %v273, %v641
  %v643 = vpop.f32.mrb[0].mxu0
  %644 = vmatprep.mubr.f32.mxu0 0.0
  %645 = vmatmul.mubr.f32.gmra.mrb[0].mxu0 %v375
  %v646 = vpop.f32.mrb[0].mxu0
  %v647 = vadd.f32 %v278, %v646
  %v648 = vpop.f32.mrb[0].mxu0
  %649 = vdwg.mxu0
  %v650 = vmax.f32 %v492, 0.0
  %v651 = vmax.f32 %v497, 0.0
  %v652 = vmax.f32 %v502, 0.0
  %v653 = vmax.f32 %v507, 0.0
  %v654 = vmax.f32 %v512, 0.0
  %v655 = vmax.f32 %v517, 0.0
  %v656 = vmax.f32 %v522, 0.0
  %v657 = vmax.f32 %v527, 0.0
  %v658 = vmax.f32 %v532, 0.0
  %v659 = vmax.f32 %v537, 0.0
  %v660 = vmax.f32 %v542, 0.0
  %v661 = vmax.f32 %v547, 0.0
  %v662 = vmax.f32 %v552, 0.0
  %v663 = vmax.f32 %v557, 0.0
  %v664 = vmax.f32 %v562, 0.0
  %v665 = vmax.f32 %v567, 0.0
  %v666 = vmax.f32 %v572, 0.0
  %v667 = vmax.f32 %v577, 0.0
  %v668 = vmax.f32 %v582, 0.0
  %v669 = vmax.f32 %v587, 0.0
  %v670 = vmax.f32 %v592, 0.0
  %v671 = vmax.f32 %v597, 0.0
  %v672 = vmax.f32 %v602, 0.0
  %v673 = vmax.f32 %v607, 0.0
  %v674 = vmax.f32 %v612, 0.0
  %v675 = vmax.f32 %v617, 0.0
  %v676 = vmax.f32 %v622, 0.0
  %v677 = vmax.f32 %v627, 0.0
  %v678 = vmax.f32 %v632, 0.0
  %v679 = vmax.f32 %v637, 0.0
  %v680 = vmax.f32 %v642, 0.0
  %v681 = vmax.f32 %v647, 0.0
  %v682 = vld [vmem:[%s3] sm:$0xff]
  %v683 = vld [vmem:[%s3 + $0x8] sm:$0xff]
  %v684 = vld [vmem:[%s3 + $0x10] sm:$0xff]
  %v685 = vld [vmem:[%s3 + $0x18] sm:$0xff]
  %v686 = vld [vmem:[%s3 + $0x20] sm:$0xff]
  %v687 = vld [vmem:[%s3 + $0x28] sm:$0xff]
  %v688 = vld [vmem:[%s3 + $0x30] sm:$0xff]
  %v689 = vld [vmem:[%s3 + $0x38] sm:$0xff]
  %v690 = vld [vmem:[%s3 + $0x40] sm:$0xff]
  %v691 = vld [vmem:[%s3 + $0x48] sm:$0xff]
  %v692 = vld [vmem:[%s3 + $0x50] sm:$0xff]
  %v693 = vld [vmem:[%s3 + $0x58] sm:$0xff]
  %v694 = vld [vmem:[%s3 + $0x60] sm:$0xff]
  %v695 = vld [vmem:[%s3 + $0x68] sm:$0xff]
  %v696 = vld [vmem:[%s3 + $0x70] sm:$0xff]
  %v697 = vld [vmem:[%s3 + $0x78] sm:$0xff]
  %v698 = vld [vmem:[%s3 + $0x80] sm:$0xff]
  %v699 = vld [vmem:[%s3 + $0x88] sm:$0xff]
  %v700 = vld [vmem:[%s3 + $0x90] sm:$0xff]
  %v701 = vld [vmem:[%s3 + $0x98] sm:$0xff]
  %v702 = vld [vmem:[%s3 + $0xa0] sm:$0xff]
  %v703 = vld [vmem:[%s3 + $0xa8] sm:$0xff]
  %v704 = vld [vmem:[%s3 + $0xb0] sm:$0xff]
  %v705 = vld [vmem:[%s3 + $0xb8] sm:$0xff]
  %v706 = vld [vmem:[%s3 + $0xc0] sm:$0xff]
  %v707 = vld [vmem:[%s3 + $0xc8] sm:$0xff]
  %v708 = vld [vmem:[%s3 + $0xd0] sm:$0xff]
  %v709 = vld [vmem:[%s3 + $0xd8] sm:$0xff]
  %v710 = vld [vmem:[%s3 + $0xe0] sm:$0xff]
  %v711 = vld [vmem:[%s3 + $0xe8] sm:$0xff]
  %v712 = vld [vmem:[%s3 + $0xf0] sm:$0xff]
  %v713 = vld [vmem:[%s3 + $0xf8] sm:$0xff]
  %v714 = vld [vmem:[%s4] sm:$0xff]
  %v715 = vld [vmem:[%s4 + $0x8] sm:$0xff]
  %v716 = vld [vmem:[%s4 + $0x10] sm:$0xff]
  %v717 = vld [vmem:[%s4 + $0x18] sm:$0xff]
  %v718 = vld [vmem:[%s4 + $0x20] sm:$0xff]
  %v719 = vld [vmem:[%s4 + $0x28] sm:$0xff]
  %v720 = vld [vmem:[%s4 + $0x30] sm:$0xff]
  %v721 = vld [vmem:[%s4 + $0x38] sm:$0xff]
  %v722 = vld [vmem:[%s4 + $0x40] sm:$0xff]
  %v723 = vld [vmem:[%s4 + $0x48] sm:$0xff]
  %v724 = vld [vmem:[%s4 + $0x50] sm:$0xff]
  %v725 = vld [vmem:[%s4 + $0x58] sm:$0xff]
  %v726 = vld [vmem:[%s4 + $0x60] sm:$0xff]
  %v727 = vld [vmem:[%s4 + $0x68] sm:$0xff]
  %v728 = vld [vmem:[%s4 + $0x70] sm:$0xff]
  %v729 = vld [vmem:[%s4 + $0x78] sm:$0xff]
  %731 = vset.pattern.permute.xlu0 0
  %732 = vperm.xlu0 %731, %v714
  %v733 = vpop.permute.xlu0 %732
  %736 = vset.pattern.permute.xlu0 0
  %737 = vperm.xlu0 %736, %v715
  %v738 = vpop.permute.xlu0 %737
  %741 = vset.pattern.permute.xlu0 0
  %742 = vperm.xlu0 %741, %v716
  %v743 = vpop.permute.xlu0 %742
  %746 = vset.pattern.permute.xlu0 0
  %747 = vperm.xlu0 %746, %v717
  %v748 = vpop.permute.xlu0 %747
  %751 = vset.pattern.permute.xlu0 0
  %752 = vperm.xlu0 %751, %v718
  %v753 = vpop.permute.xlu0 %752
  %756 = vset.pattern.permute.xlu0 0
  %757 = vperm.xlu0 %756, %v719
  %v758 = vpop.permute.xlu0 %757
  %761 = vset.pattern.permute.xlu0 0
  %762 = vperm.xlu0 %761, %v720
  %v763 = vpop.permute.xlu0 %762
  %766 = vset.pattern.permute.xlu0 0
  %767 = vperm.xlu0 %766, %v721
  %v768 = vpop.permute.xlu0 %767
  %771 = vset.pattern.permute.xlu0 0
  %772 = vperm.xlu0 %771, %v722
  %v773 = vpop.permute.xlu0 %772
  %776 = vset.pattern.permute.xlu0 0
  %777 = vperm.xlu0 %776, %v723
  %v778 = vpop.permute.xlu0 %777
  %781 = vset.pattern.permute.xlu0 0
  %782 = vperm.xlu0 %781, %v724
  %v783 = vpop.permute.xlu0 %782
  %786 = vset.pattern.permute.xlu0 0
  %787 = vperm.xlu0 %786, %v725
  %v788 = vpop.permute.xlu0 %787
  %791 = vset.pattern.permute.xlu0 0
  %792 = vperm.xlu0 %791, %v726
  %v793 = vpop.permute.xlu0 %792
  %796 = vset.pattern.permute.xlu0 0
  %797 = vperm.xlu0 %796, %v727
  %v798 = vpop.permute.xlu0 %797
  %801 = vset.pattern.permute.xlu0 0
  %802 = vperm.xlu0 %801, %v728
  %v803 = vpop.permute.xlu0 %802
  %806 = vset.pattern.permute.xlu0 0
  %807 = vperm.xlu0 %806, %v729
  %v808 = vpop.permute.xlu0 %807
  %810 = vmatprep.subr.mxu0 0.0
  %811 = vmatpush1.msra.mxu0 %v650
  %812 = vmatprep.subr.mxu0 0.0
  %813 = vmatpush1.msra.mxu0 %v651
  %814 = vmatprep.subr.mxu0 0.0
  %815 = vmatpush1.msra.mxu0 %v652
  %816 = vmatprep.subr.mxu0 0.0
  %817 = vmatpush1.msra.mxu0 %v653
  %818 = vmatprep.subr.mxu0 0.0
  %819 = vmatpush1.msra.mxu0 %v654
  %820 = vmatprep.subr.mxu0 0.0
  %821 = vmatpush1.msra.mxu0 %v655
  %822 = vmatprep.subr.mxu0 0.0
  %823 = vmatpush1.msra.mxu0 %v656
  %824 = vmatprep.subr.mxu0 0.0
  %825 = vmatpush1.msra.mxu0 %v657
  %826 = vmatprep.subr.mxu0 0.0
  %827 = vmatpush1.msra.mxu0 %v658
  %828 = vmatprep.subr.mxu0 0.0
  %829 = vmatpush1.msra.mxu0 %v659
  %830 = vmatprep.subr.mxu0 0.0
  %831 = vmatpush1.msra.mxu0 %v660
  %832 = vmatprep.subr.mxu0 0.0
  %833 = vmatpush1.msra.mxu0 %v661
  %834 = vmatprep.subr.mxu0 0.0
  %835 = vmatpush1.msra.mxu0 %v662
  %836 = vmatprep.subr.mxu0 0.0
  %837 = vmatpush1.msra.mxu0 %v663
  %838 = vmatprep.subr.mxu0 0.0
  %839 = vmatpush1.msra.mxu0 %v664
  %840 = vmatprep.subr.mxu0 0.0
  %841 = vmatpush1.msra.mxu0 %v665
  %842 = vmatprep.subr.mxu0 0.0
  %843 = vmatpush1.msra.mxu0 %v666
  %844 = vmatprep.subr.mxu0 0.0
  %845 = vmatpush1.msra.mxu0 %v667
  %846 = vmatprep.subr.mxu0 0.0
  %847 = vmatpush1.msra.mxu0 %v668
  %848 = vmatprep.subr.mxu0 0.0
  %849 = vmatpush1.msra.mxu0 %v669
  %850 = vmatprep.subr.mxu0 0.0
  %851 = vmatpush1.msra.mxu0 %v670
  %852 = vmatprep.subr.mxu0 0.0
  %853 = vmatpush1.msra.mxu0 %v671
  %854 = vmatprep.subr.mxu0 0.0
  %855 = vmatpush1.msra.mxu0 %v672
  %856 = vmatprep.subr.mxu0 0.0
  %857 = vmatpush1.msra.mxu0 %v673
  %858 = vmatprep.subr.mxu0 0.0
  %859 = vmatpush1.msra.mxu0 %v674
  %860 = vmatprep.subr.mxu0 0.0
  %861 = vmatpush1.msra.mxu0 %v675
  %862 = vmatprep.subr.mxu0 0.0
  %863 = vmatpush1.msra.mxu0 %v676
  %864 = vmatprep.subr.mxu0 0.0
  %865 = vmatpush1.msra.mxu0 %v677
  %866 = vmatprep.subr.mxu0 0.0
  %867 = vmatpush1.msra.mxu0 %v678
  %868 = vmatprep.subr.mxu0 0.0
  %869 = vmatpush1.msra.mxu0 %v679
  %870 = vmatprep.subr.mxu0 0.0
  %871 = vmatpush1.msra.mxu0 %v680
  %872 = vmatprep.subr.mxu0 0.0
  %873 = vmatpush1.msra.mxu0 %v681
  %874 = vmatprep.mubr.f32.mxu0 %v683
  %875 = vmatmul.mubr.f32.gmra.mrb[0].mxu0 %v682
  %v876 = vpop.f32.mrb[0].mxu0
  %v877 = vadd.f32 %v733, %v876
  %v878 = vpop.f32.mrb[0].mxu0
  %879 = vmatprep.mubr.f32.mxu0 %v685
  %880 = vmatmul.mubr.f32.gmra.mrb[0].mxu0 %v684
  %v881 = vpop.f32.mrb[0].mxu0
  %v882 = vadd.f32 %v738, %v881
  %v883 = vpop.f32.mrb[0].mxu0
  %884 = vmatprep.mubr.f32.mxu0 %v687
  %885 = vmatmul.mubr.f32.gmra.mrb[0].mxu0 %v686
  %v886 = vpop.f32.mrb[0].mxu0
  %v887 = vadd.f32 %v743, %v886
  %v888 = vpop.f32.mrb[0].mxu0
  %889 = vmatprep.mubr.f32.mxu0 %v689
  %890 = vmatmul.mubr.f32.gmra.mrb[0].mxu0 %v688
  %v891 = vpop.f32.mrb[0].mxu0
  %v892 = vadd.f32 %v748, %v891
  %v893 = vpop.f32.mrb[0].mxu0
  %894 = vmatprep.mubr.f32.mxu0 %v691
  %895 = vmatmul.mubr.f32.gmra.mrb[0].mxu0 %v690
  %v896 = vpop.f32.mrb[0].mxu0
  %v897 = vadd.f32 %v753, %v896
  %v898 = vpop.f32.mrb[0].mxu0
  %899 = vmatprep.mubr.f32.mxu0 %v693
  %900 = vmatmul.mubr.f32.gmra.mrb[0].mxu0 %v692
  %v901 = vpop.f32.mrb[0].mxu0
  %v902 = vadd.f32 %v758, %v901
  %v903 = vpop.f32.mrb[0].mxu0
  %904 = vmatprep.mubr.f32.mxu0 %v695
  %905 = vmatmul.mubr.f32.gmra.mrb[0].mxu0 %v694
  %v906 = vpop.f32.mrb[0].mxu0
  %v907 = vadd.f32 %v763, %v906
  %v908 = vpop.f32.mrb[0].mxu0
  %909 = vmatprep.mubr.f32.mxu0 %v697
  %910 = vmatmul.mubr.f32.gmra.mrb[0].mxu0 %v696
  %v911 = vpop.f32.mrb[0].mxu0
  %v912 = vadd.f32 %v768, %v911
  %v913 = vpop.f32.mrb[0].mxu0
  %914 = vmatprep.mubr.f32.mxu0 %v699
  %915 = vmatmul.mubr.f32.gmra.mrb[0].mxu0 %v698
  %v916 = vpop.f32.mrb[0].mxu0
  %v917 = vadd.f32 %v773, %v916
  %v918 = vpop.f32.mrb[0].mxu0
  %919 = vmatprep.mubr.f32.mxu0 %v701
  %920 = vmatmul.mubr.f32.gmra.mrb[0].mxu0 %v700
  %v921 = vpop.f32.mrb[0].mxu0
  %v922 = vadd.f32 %v778, %v921
  %v923 = vpop.f32.mrb[0].mxu0
  %924 = vmatprep.mubr.f32.mxu0 %v703
  %925 = vmatmul.mubr.f32.gmra.mrb[0].mxu0 %v702
  %v926 = vpop.f32.mrb[0].mxu0
  %v927 = vadd.f32 %v783, %v926
  %v928 = vpop.f32.mrb[0].mxu0
  %929 = vmatprep.mubr.f32.mxu0 %v705
  %930 = vmatmul.mubr.f32.gmra.mrb[0].mxu0 %v704
  %v931 = vpop.f32.mrb[0].mxu0
  %v932 = vadd.f32 %v788, %v931
  %v933 = vpop.f32.mrb[0].mxu0
  %934 = vmatprep.mubr.f32.mxu0 %v707
  %935 = vmatmul.mubr.f32.gmra.mrb[0].mxu0 %v706
  %v936 = vpop.f32.mrb[0].mxu0
  %v937 = vadd.f32 %v793, %v936
  %v938 = vpop.f32.mrb[0].mxu0
  %939 = vmatprep.mubr.f32.mxu0 %v709
  %940 = vmatmul.mubr.f32.gmra.mrb[0].mxu0 %v708
  %v941 = vpop.f32.mrb[0].mxu0
  %v942 = vadd.f32 %v798, %v941
  %v943 = vpop.f32.mrb[0].mxu0
  %944 = vmatprep.mubr.f32.mxu0 %v711
  %945 = vmatmul.mubr.f32.gmra.mrb[0].mxu0 %v710
  %v946 = vpop.f32.mrb[0].mxu0
  %v947 = vadd.f32 %v803, %v946
  %v948 = vpop.f32.mrb[0].mxu0
  %949 = vmatprep.mubr.f32.mxu0 %v713
  %950 = vmatmul.mubr.f32.gmra.mrb[0].mxu0 %v712
  %v951 = vpop.f32.mrb[0].mxu0
  %v952 = vadd.f32 %v808, %v951
  %v953 = vpop.f32.mrb[0].mxu0
  %954 = vdwg.mxu0
  %v955 = vmax.f32 %v877, 0.0
  %v956 = vmax.f32 %v882, 0.0
  %v957 = vmax.f32 %v887, 0.0
  %v958 = vmax.f32 %v892, 0.0
  %v959 = vmax.f32 %v897, 0.0
  %v960 = vmax.f32 %v902, 0.0
  %v961 = vmax.f32 %v907, 0.0
  %v962 = vmax.f32 %v912, 0.0
  %v963 = vmax.f32 %v917, 0.0
  %v964 = vmax.f32 %v922, 0.0
  %v965 = vmax.f32 %v927, 0.0
  %v966 = vmax.f32 %v932, 0.0
  %v967 = vmax.f32 %v937, 0.0
  %v968 = vmax.f32 %v942, 0.0
  %v969 = vmax.f32 %v947, 0.0
  %v970 = vmax.f32 %v952, 0.0
  %v971 = vld [vmem:[%s5] sm:$0xff]
  %v972 = vld [vmem:[%s5 + $0x8] sm:$0xff]
  %v973 = vld [vmem:[%s5 + $0x10] sm:$0xff]
  %v974 = vld [vmem:[%s5 + $0x18] sm:$0xff]
  %v975 = vld [vmem:[%s5 + $0x20] sm:$0xff]
  %v976 = vld [vmem:[%s5 + $0x28] sm:$0xff]
  %v977 = vld [vmem:[%s5 + $0x30] sm:$0xff]
  %v978 = vld [vmem:[%s5 + $0x38] sm:$0xff]
  %v979 = vld [vmem:[%s6] sm:$0xff]
  %v980 = vld [vmem:[%s6 + $0x8] sm:$0xff]
  %v981 = vld [vmem:[%s6 + $0x10] sm:$0xff]
  %v982 = vld [vmem:[%s6 + $0x18] sm:$0xff]
  %v983 = vld [vmem:[%s6 + $0x20] sm:$0xff]
  %v984 = vld [vmem:[%s6 + $0x28] sm:$0xff]
  %v985 = vld [vmem:[%s6 + $0x30] sm:$0xff]
  %v986 = vld [vmem:[%s6 + $0x38] sm:$0xff]
  %988 = vset.pattern.permute.xlu0 0
  %989 = vperm.xlu0 %988, %v979
  %v990 = vpop.permute.xlu0 %989
  %993 = vset.pattern.permute.xlu0 0
  %994 = vperm.xlu0 %993, %v980
  %v995 = vpop.permute.xlu0 %994
  %998 = vset.pattern.permute.xlu0 0
  %999 = vperm.xlu0 %998, %v981
  %v1000 = vpop.permute.xlu0 %999
  %1003 = vset.pattern.permute.xlu0 0
  %1004 = vperm.xlu0 %1003, %v982
  %v1005 = vpop.permute.xlu0 %1004
  %1008 = vset.pattern.permute.xlu0 0
  %1009 = vperm.xlu0 %1008, %v983
  %v1010 = vpop.permute.xlu0 %1009
  %1013 = vset.pattern.permute.xlu0 0
  %1014 = vperm.xlu0 %1013, %v984
  %v1015 = vpop.permute.xlu0 %1014
  %1018 = vset.pattern.permute.xlu0 0
  %1019 = vperm.xlu0 %1018, %v985
  %v1020 = vpop.permute.xlu0 %1019
  %1023 = vset.pattern.permute.xlu0 0
  %1024 = vperm.xlu0 %1023, %v986
  %v1025 = vpop.permute.xlu0 %1024
  %1027 = vmatprep.subr.mxu0 0.0
  %1028 = vmatpush1.msra.mxu0 %v955
  %1029 = vmatprep.subr.mxu0 0.0
  %1030 = vmatpush1.msra.mxu0 %v956
  %1031 = vmatprep.subr.mxu0 0.0
  %1032 = vmatpush1.msra.mxu0 %v957
  %1033 = vmatprep.subr.mxu0 0.0
  %1034 = vmatpush1.msra.mxu0 %v958
  %1035 = vmatprep.subr.mxu0 0.0
  %1036 = vmatpush1.msra.mxu0 %v959
  %1037 = vmatprep.subr.mxu0 0.0
  %1038 = vmatpush1.msra.mxu0 %v960
  %1039 = vmatprep.subr.mxu0 0.0
  %1040 = vmatpush1.msra.mxu0 %v961
  %1041 = vmatprep.subr.mxu0 0.0
  %1042 = vmatpush1.msra.mxu0 %v962
  %1043 = vmatprep.subr.mxu0 0.0
  %1044 = vmatpush1.msra.mxu0 %v963
  %1045 = vmatprep.subr.mxu0 0.0
  %1046 = vmatpush1.msra.mxu0 %v964
  %1047 = vmatprep.subr.mxu0 0.0
  %1048 = vmatpush1.msra.mxu0 %v965
  %1049 = vmatprep.subr.mxu0 0.0
  %1050 = vmatpush1.msra.mxu0 %v966
  %1051 = vmatprep.subr.mxu0 0.0
  %1052 = vmatpush1.msra.mxu0 %v967
  %1053 = vmatprep.subr.mxu0 0.0
  %1054 = vmatpush1.msra.mxu0 %v968
  %1055 = vmatprep.subr.mxu0 0.0
  %1056 = vmatpush1.msra.mxu0 %v969
  %1057 = vmatprep.subr.mxu0 0.0
  %1058 = vmatpush1.msra.mxu0 %v970
  %1059 = vmatprep.subr.mxu0 0.0
  %1060 = vmatpush1.msra.mxu0 0.0
  %1061 = vmatprep.subr.mxu0 0.0
  %1062 = vmatpush1.msra.mxu0 0.0
  %1063 = vmatprep.subr.mxu0 0.0
  %1064 = vmatpush1.msra.mxu0 0.0
  %1065 = vmatprep.subr.mxu0 0.0
  %1066 = vmatpush1.msra.mxu0 0.0
  %1067 = vmatprep.subr.mxu0 0.0
  %1068 = vmatpush1.msra.mxu0 0.0
  %1069 = vmatprep.subr.mxu0 0.0
  %1070 = vmatpush1.msra.mxu0 0.0
  %1071 = vmatprep.subr.mxu0 0.0
  %1072 = vmatpush1.msra.mxu0 0.0
  %1073 = vmatprep.subr.mxu0 0.0
  %1074 = vmatpush1.msra.mxu0 0.0
  %1075 = vmatprep.subr.mxu0 0.0
  %1076 = vmatpush1.msra.mxu0 0.0
  %1077 = vmatprep.subr.mxu0 0.0
  %1078 = vmatpush1.msra.mxu0 0.0
  %1079 = vmatprep.subr.mxu0 0.0
  %1080 = vmatpush1.msra.mxu0 0.0
  %1081 = vmatprep.subr.mxu0 0.0
  %1082 = vmatpush1.msra.mxu0 0.0
  %1083 = vmatprep.subr.mxu0 0.0
  %1084 = vmatpush1.msra.mxu0 0.0
  %1085 = vmatprep.subr.mxu0 0.0
  %1086 = vmatpush1.msra.mxu0 0.0
  %1087 = vmatprep.subr.mxu0 0.0
  %1088 = vmatpush1.msra.mxu0 0.0
  %1089 = vmatprep.subr.mxu0 0.0
  %1090 = vmatpush1.msra.mxu0 0.0
  %1091 = vmatprep.mubr.f32.mxu0 0.0
  %1092 = vmatmul.mubr.f32.gmra.mrb[0].mxu0 %v971
  %v1093 = vpop.f32.mrb[0].mxu0
  %v1094 = vadd.f32 %v990, %v1093
  %v1095 = vpop.f32.mrb[0].mxu0
  %1096 = vmatprep.mubr.f32.mxu0 0.0
  %1097 = vmatmul.mubr.f32.gmra.mrb[0].mxu0 %v972
  %v1098 = vpop.f32.mrb[0].mxu0
  %v1099 = vadd.f32 %v995, %v1098
  %v1100 = vpop.f32.mrb[0].mxu0
  %1101 = vmatprep.mubr.f32.mxu0 0.0
  %1102 = vmatmul.mubr.f32.gmra.mrb[0].mxu0 %v973
  %v1103 = vpop.f32.mrb[0].mxu0
  %v1104 = vadd.f32 %v1000, %v1103
  %v1105 = vpop.f32.mrb[0].mxu0
  %1106 = vmatprep.mubr.f32.mxu0 0.0
  %1107 = vmatmul.mubr.f32.gmra.mrb[0].mxu0 %v974
  %v1108 = vpop.f32.mrb[0].mxu0
  %v1109 = vadd.f32 %v1005, %v1108
  %v1110 = vpop.f32.mrb[0].mxu0
  %1111 = vmatprep.mubr.f32.mxu0 0.0
  %1112 = vmatmul.mubr.f32.gmra.mrb[0].mxu0 %v975
  %v1113 = vpop.f32.mrb[0].mxu0
  %v1114 = vadd.f32 %v1010, %v1113
  %v1115 = vpop.f32.mrb[0].mxu0
  %1116 = vmatprep.mubr.f32.mxu0 0.0
  %1117 = vmatmul.mubr.f32.gmra.mrb[0].mxu0 %v976
  %v1118 = vpop.f32.mrb[0].mxu0
  %v1119 = vadd.f32 %v1015, %v1118
  %v1120 = vpop.f32.mrb[0].mxu0
  %1121 = vmatprep.mubr.f32.mxu0 0.0
  %1122 = vmatmul.mubr.f32.gmra.mrb[0].mxu0 %v977
  %v1123 = vpop.f32.mrb[0].mxu0
  %v1124 = vadd.f32 %v1020, %v1123
  %v1125 = vpop.f32.mrb[0].mxu0
  %1126 = vmatprep.mubr.f32.mxu0 0.0
  %1127 = vmatmul.mubr.f32.gmra.mrb[0].mxu0 %v978
  %v1128 = vpop.f32.mrb[0].mxu0
  %v1129 = vadd.f32 %v1025, %v1128
  %v1130 = vpop.f32.mrb[0].mxu0
  %1131 = vdwg.mxu0
  %v1132 = vmax.f32 %v1094, 0.0
  %v1133 = vmax.f32 %v1099, 0.0
  %v1134 = vmax.f32 %v1104, 0.0
  %v1135 = vmax.f32 %v1109, 0.0
  %v1136 = vmax.f32 %v1114, 0.0
  %v1137 = vmax.f32 %v1119, 0.0
  %v1138 = vmax.f32 %v1124, 0.0
  %v1139 = vmax.f32 %v1129, 0.0
  %v1140 = vld [vmem:[%s7] sm:$0xff]
  %v1141 = vld [vmem:[%s7 + $0x8] sm:$0xff]
  %v1142 = vld [vmem:[%s8] sm:$0xff]
  %v1143 = vld [vmem:[%s8 + $0x8] sm:$0xff]
  %1145 = vset.pattern.permute.xlu0 0
  %1146 = vperm.xlu0 %1145, %v1142
  %v1147 = vpop.permute.xlu0 %1146
  %1150 = vset.pattern.permute.xlu0 0
  %1151 = vperm.xlu0 %1150, %v1143
  %v1152 = vpop.permute.xlu0 %1151
  %vm1154 = vcmask 523264
  %v1156 = vsel %vm1154, %v1140, 0
  %v1159 = vsel %vm1154, %v1141, 0
  %1161 = vmatprep.subr.mxu0 0.0
  %1162 = vmatpush1.msra.mxu0 %v1132
  %1163 = vmatprep.subr.mxu0 0.0
  %1164 = vmatpush1.msra.mxu0 %v1133
  %1165 = vmatprep.subr.mxu0 0.0
  %1166 = vmatpush1.msra.mxu0 %v1134
  %1167 = vmatprep.subr.mxu0 0.0
  %1168 = vmatpush1.msra.mxu0 %v1135
  %1169 = vmatprep.subr.mxu0 0.0
  %1170 = vmatpush1.msra.mxu0 %v1136
  %1171 = vmatprep.subr.mxu0 0.0
  %1172 = vmatpush1.msra.mxu0 %v1137
  %1173 = vmatprep.subr.mxu0 0.0
  %1174 = vmatpush1.msra.mxu0 %v1138
  %1175 = vmatprep.subr.mxu0 0.0
  %1176 = vmatpush1.msra.mxu0 %v1139
  %1177 = vmatprep.subr.mxu0 0.0
  %1178 = vmatpush1.msra.mxu0 0.0
  %1179 = vmatprep.subr.mxu0 0.0
  %1180 = vmatpush1.msra.mxu0 0.0
  %1181 = vmatprep.subr.mxu0 0.0
  %1182 = vmatpush1.msra.mxu0 0.0
  %1183 = vmatprep.subr.mxu0 0.0
  %1184 = vmatpush1.msra.mxu0 0.0
  %1185 = vmatprep.subr.mxu0 0.0
  %1186 = vmatpush1.msra.mxu0 0.0
  %1187 = vmatprep.subr.mxu0 0.0
  %1188 = vmatpush1.msra.mxu0 0.0
  %1189 = vmatprep.subr.mxu0 0.0
  %1190 = vmatpush1.msra.mxu0 0.0
  %1191 = vmatprep.subr.mxu0 0.0
  %1192 = vmatpush1.msra.mxu0 0.0
  %1193 = vmatprep.subr.mxu0 0.0
  %1194 = vmatpush1.msra.mxu0 0.0
  %1195 = vmatprep.subr.mxu0 0.0
  %1196 = vmatpush1.msra.mxu0 0.0
  %1197 = vmatprep.subr.mxu0 0.0
  %1198 = vmatpush1.msra.mxu0 0.0
  %1199 = vmatprep.subr.mxu0 0.0
  %1200 = vmatpush1.msra.mxu0 0.0
  %1201 = vmatprep.subr.mxu0 0.0
  %1202 = vmatpush1.msra.mxu0 0.0
  %1203 = vmatprep.subr.mxu0 0.0
  %1204 = vmatpush1.msra.mxu0 0.0
  %1205 = vmatprep.subr.mxu0 0.0
  %1206 = vmatpush1.msra.mxu0 0.0
  %1207 = vmatprep.subr.mxu0 0.0
  %1208 = vmatpush1.msra.mxu0 0.0
  %1209 = vmatprep.subr.mxu0 0.0
  %1210 = vmatpush1.msra.mxu0 0.0
  %1211 = vmatprep.subr.mxu0 0.0
  %1212 = vmatpush1.msra.mxu0 0.0
  %1213 = vmatprep.subr.mxu0 0.0
  %1214 = vmatpush1.msra.mxu0 0.0
  %1215 = vmatprep.subr.mxu0 0.0
  %1216 = vmatpush1.msra.mxu0 0.0
  %1217 = vmatprep.subr.mxu0 0.0
  %1218 = vmatpush1.msra.mxu0 0.0
  %1219 = vmatprep.subr.mxu0 0.0
  %1220 = vmatpush1.msra.mxu0 0.0
  %1221 = vmatprep.subr.mxu0 0.0
  %1222 = vmatpush1.msra.mxu0 0.0
  %1223 = vmatprep.subr.mxu0 0.0
  %1224 = vmatpush1.msra.mxu0 0.0
  %1225 = vmatprep.mubr.f32.mxu0 0.0
  %1226 = vmatmul.mubr.f32.gmra.mrb[0].mxu0 %v1156
  %v1227 = vpop.f32.mrb[0].mxu0
  %v1228 = vadd.f32 %v1147, %v1227
  %v1229 = vpop.f32.mrb[0].mxu0
  %1230 = vmatprep.mubr.f32.mxu0 0.0
  %1231 = vmatmul.mubr.f32.gmra.mrb[0].mxu0 %v1159
  %v1232 = vpop.f32.mrb[0].mxu0
  %v1233 = vadd.f32 %v1152, %v1232
  %v1234 = vpop.f32.mrb[0].mxu0
  %1235 = vdwg.mxu0
  %v1236 = vmax.f32 %v1228, 0.0
  %v1237 = vmax.f32 %v1233, 0.0
  %v1238 = vld [vmem:[%s9] sm:$0xff]
  %v1239 = vld [vmem:[%s9 + $0x8] sm:$0xff]
  %1241 = vset.pattern.permute.xlu0 0
  %1242 = vperm.xlu0 %1241, %v1238
  %v1243 = vpop.permute.xlu0 %1242
  %1246 = vset.pattern.permute.xlu0 0
  %1247 = vperm.xlu0 %1246, %v1239
  %v1248 = vpop.permute.xlu0 %1247
  %v1250 = vmul.f32 %v1236, %v1243
  %v1251 = vmul.f32 %v1237, %v1248
  %v1252 = vadd.f32 %v1250, %v1251
  %v1253 = vrot.slane %v1252, 4
  %v1254 = vadd.f32 %v1252, %v1253
  %v1255 = vrot.slane %v1254, 2
  %v1256 = vadd.f32 %v1254, %v1255
  %v1257 = vrot.slane %v1256, 1
  %v1258 = vadd.f32 %v1256, %v1257
  %v1259 = vld [vmem:[#allocation2] sm:$0x1]
  %1261 = vset.pattern.permute.xlu0 0
  %1262 = vperm.xlu0 %1261, %v1259
  %v1263 = vpop.permute.xlu0 %1262
  %v1265 = vlaneseq
  %v1266 = vshrl.u32 %v1265, 7
  %v1267 = vsub.s32 0, %v1266
  %v1268 = vrot.slane %v1263, %v1267
  %v1269 = vadd.f32 %v1258, %v1268
  %v1270 = vxor.u32 %v1269, 2147483648
  %v1271 = vmul.f32 %v1270, 1.442695
  %v1272 = vpow.pop %v1271
  %v1273 = vadd.f32 %v1272, 1.0
  %v1274 = vrcp.pop %v1273
  %v1275 = vmul.f32 1.0, %v1274
  %1276 = vst [vmem:[%s11] sm:$0x1] %v1275
  // Predicated region
  $region46: #{mlp_forward.1} parent=0 // pred_check
    _
  $region47: #{mlp_forward.1} parent=0 // pred_check_branch
    %1278 = sbr.rel (0) target = $region49
  $region48: #{mlp_forward.1} parent=0 // pred_region
    _
  $region49: #{mlp_forward.1} parent=0 // pred_fallthru
    _
  // Predicated region
  $region50: #{mlp_forward.1} parent=0 // pred_check
    _
  $region51: #{mlp_forward.1} parent=0 // pred_check_branch
    %1280 = sbr.rel (0) target = $region53
  $region52: #{mlp_forward.1} parent=0 // pred_region
    _
  $region53: #{mlp_forward.1} parent=0 // pred_fallthru
    _

</llo_original>
